<compile_context>
chip_gen: v7x
topology: tpu7x:2x2x1
jax: 0.10.0
libtpu: 0.0.40
codegen_flags: <defaults>
</compile_context>

<pallas_src>
import functools

import jax
import jax.numpy as jnp
from jax import lax
from jax.experimental import pallas as pl
from jax.experimental.pallas import tpu as pltpu


def _round_up(x: int, m: int) -> int:
    return (x + m - 1) // m * m


def generate_simplex_etf(hidden_dim: int, num_classes: int, key) -> jnp.ndarray:
    """Deterministic simplex ETF of shape (hidden_dim, num_classes)."""
    a = jax.random.normal(key, (hidden_dim, num_classes), dtype=jnp.float32)
    u, _ = jnp.linalg.qr(a)  # orthonormal columns
    k = num_classes
    center = jnp.eye(k, dtype=jnp.float32) - jnp.ones((k, k), jnp.float32) / k
    etf = jnp.sqrt(k / (k - 1.0)) * (u @ center)
    return etf.astype(jnp.float32)


def _layer_nn_kernel(x_ref, w_in_ref, b_in_ref, wh_ref, bh_ref, etf_ref, o_ref,
                     *, num_hidden_blocks: int):
    """One batch tile; all operands VMEM resident.

    x_ref  : (TB, D)       bf16 flattened input tile
    w_in   : (D, Hd)       bf16
    b_in   : (1, Hd)       f32
    wh     : (L, Hd, Hd)   bf16
    bh     : (L, 1, Hd)    f32
    etf    : (Hd, Kp)      bf16, zero-padded to lane-dense Kp
    o_ref  : (TB, Kp)      f32 logits tile
    """
    # input_block: Linear + ReLU (bias add / ReLU in f32).
    x_inp = jnp.dot(x_ref[...], w_in_ref[...],
                    preferred_element_type=jnp.float32)
    x_inp = jnp.maximum(x_inp + b_in_ref[...], 0.0)

    def hidden_block(l, h):
        h = jnp.dot(h.astype(jnp.bfloat16), wh_ref[l],
                    preferred_element_type=jnp.float32)
        return jnp.maximum(h + bh_ref[l], 0.0)

    # Linearity of apply_ETF: sum of projections == projection of the sum.
    if num_hidden_blocks <= 4:
        h = x_inp
        h_sum = x_inp
        for l in range(num_hidden_blocks):       # static unroll for small L
            h = hidden_block(l, h)
            h_sum = h_sum + h
    else:
        def body(l, carry):
            h, h_sum = carry
            h = hidden_block(l, h)
            return h, h_sum + h
        _, h_sum = lax.fori_loop(0, num_hidden_blocks, body, (x_inp, x_inp))

    # Single lane-dense ETF projection.
    o_ref[...] = jnp.dot(h_sum.astype(jnp.bfloat16), etf_ref[...],
                         preferred_element_type=jnp.float32)


def layer_configurable_nn_forward(x_nchw, w_in, b_in, wh, bh, etf, *, tb=None):
    """x_nchw: (B, C, H, W) float32 -> logits (B, num_classes) float32."""
    b = int(x_nchw.shape[0])
    d = int(x_nchw.shape[1] * x_nchw.shape[2] * x_nchw.shape[3])
    num_hidden_blocks = int(wh.shape[0])
    hidden_dim = int(w_in.shape[1])
    num_classes = int(etf.shape[1])

    # Batch tile: multiple of 8 (f32 sublane), up to 128.
    if tb is None:
        tb = min(128, _round_up(b, 8))
    tb = max(8, _round_up(int(tb), 8))
    b_pad = _round_up(b, tb)
    k_pad = _round_up(num_classes, 128)          # lane-dense output

    # Flatten like torch.flatten (row-major NCHW), pad batch, cast to bf16.
    x_flat = x_nchw.reshape(b, d)
    if b_pad != b:
        x_flat = jnp.pad(x_flat, ((0, b_pad - b), (0, 0)))
    x_bf16 = x_flat.astype(jnp.bfloat16)

    w_in_b = w_in.astype(jnp.bfloat16)
    wh_b = wh.astype(jnp.bfloat16)
    b_in_f = b_in.reshape(1, hidden_dim).astype(jnp.float32)
    bh_f = bh.reshape(num_hidden_blocks, 1, hidden_dim).astype(jnp.float32)
    etf_p = jnp.pad(etf, ((0, 0), (0, k_pad - num_classes))).astype(jnp.bfloat16)

    # Resident VMEM footprint (bytes), x2 for double buffering + slack.
    block_bytes = (tb * d * 2
                   + d * hidden_dim * 2
                   + hidden_dim * 4
                   + num_hidden_blocks * hidden_dim * hidden_dim * 2
                   + num_hidden_blocks * hidden_dim * 4
                   + hidden_dim * k_pad * 2
                   + tb * k_pad * 4)
    vmem_limit = int(min(64 << 20, max(32 << 20, 2 * block_bytes + (4 << 20))))

    kernel = functools.partial(_layer_nn_kernel,
                               num_hidden_blocks=num_hidden_blocks)

    out_pad = pl.pallas_call(
        kernel,
        out_shape=jax.ShapeDtypeStruct((b_pad, k_pad), jnp.float32),
        grid=(b_pad // tb,),
        in_specs=[
            pl.BlockSpec((tb, d), lambda i: (i, 0)),                    # x tile
            pl.BlockSpec((d, hidden_dim), lambda i: (0, 0)),            # w_in
            pl.BlockSpec((1, hidden_dim), lambda i: (0, 0)),            # b_in
            pl.BlockSpec((num_hidden_blocks, hidden_dim, hidden_dim),
                         lambda i: (0, 0, 0)),                          # wh
            pl.BlockSpec((num_hidden_blocks, 1, hidden_dim),
                         lambda i: (0, 0, 0)),                          # bh
            pl.BlockSpec((hidden_dim, k_pad), lambda i: (0, 0)),        # etf
        ],
        out_specs=pl.BlockSpec((tb, k_pad), lambda i: (i, 0)),
        compiler_params=pltpu.CompilerParams(
            dimension_semantics=("parallel",),
            vmem_limit_bytes=vmem_limit),
    )(x_bf16, w_in_b, b_in_f, wh_b, bh_f, etf_p)

    return out_pad[:b, :num_classes]


if __name__ == "__main__":
    # Small config consistent with the module: width=height=8, channels=3,
    # hidden_layer_dim=128, num_classes=10, two hidden blocks.
    # batch=16 with TB=8 exercises a real multi-step (pipelined) batch grid.
    B, C, H, W = 16, 3, 8, 8
    D = C * H * W
    HIDDEN = 128
    NUM_CLASSES = 10
    NUM_HIDDEN_BLOCKS = 2
    TB = 8

    key = jax.random.PRNGKey(0)
    k_x, k_win, k_bin, k_wh, k_bh, k_etf = jax.random.split(key, 6)

    x = jax.random.normal(k_x, (B, C, H, W), dtype=jnp.float32)

    # Synthetic parameters; nn.Linear shapes stored transposed as
    # (in_features, out_features) for x @ W.
    w_in = jax.random.normal(k_win, (D, HIDDEN), dtype=jnp.float32) * 0.05
    b_in = jax.random.normal(k_bin, (1, HIDDEN), dtype=jnp.float32) * 0.05
    wh = jax.random.normal(k_wh, (NUM_HIDDEN_BLOCKS, HIDDEN, HIDDEN),
                           dtype=jnp.float32) * 0.05
    bh = jax.random.normal(k_bh, (NUM_HIDDEN_BLOCKS, 1, HIDDEN),
                           dtype=jnp.float32) * 0.05
    etf = generate_simplex_etf(HIDDEN, NUM_CLASSES, k_etf)

    out = layer_configurable_nn_forward(x, w_in, b_in, wh, bh, etf, tb=TB)
    out = jax.block_until_ready(out)
    assert out.shape == (B, NUM_CLASSES)

    # Pure-JAX f32 reference of the exact module semantics
    # (per-block ETF projections, i.e. before the linearity refactor).
    x_flat = x.reshape(B, D)
    x_inp = jnp.maximum(x_flat @ w_in + b_in, 0.0)
    acts = [x_inp]
    h = x_inp
    for l in range(NUM_HIDDEN_BLOCKS):
        h = jnp.maximum(h @ wh[l] + bh[l], 0.0)
        acts.append(h)
    ref_f32 = sum(a @ etf for a in acts)

    # bf16-mirrored reference (same operand quantization as the kernel).
    xb = x_flat.astype(jnp.bfloat16)
    hb = jnp.maximum(
        jnp.dot(xb, w_in.astype(jnp.bfloat16),
                preferred_element_type=jnp.float32) + b_in, 0.0)
    hsum = hb
    for l in range(NUM_HIDDEN_BLOCKS):
        hb = jnp.maximum(
            jnp.dot(hb.astype(jnp.bfloat16), wh[l].astype(jnp.bfloat16),
                    preferred_element_type=jnp.float32) + bh[l], 0.0)
        hsum = hsum + hb
    ref_bf16 = jnp.dot(hsum.astype(jnp.bfloat16), etf.astype(jnp.bfloat16),
                       preferred_element_type=jnp.float32)

    err_bf16 = float(jnp.max(jnp.abs(out - ref_bf16)))
    err_f32 = float(jnp.max(jnp.abs(out - ref_f32)))
    assert jnp.allclose(out, ref_bf16, atol=2e-3, rtol=2e-3), err_bf16
    assert jnp.allclose(out, ref_f32, atol=1e-1, rtol=1e-1), err_f32

    print("KERNEL_OK")
</pallas_src>

<mosaic_0001>
module attributes {stable_mosaic.version = 11 : i64} {
  func.func @_layer_nn_kernel(%arg0: i32, %arg1: memref<8x192xbf16, #tpu.memory_space<vmem>>, %arg2: memref<192x128xbf16, #tpu.memory_space<vmem>>, %arg3: memref<1x128xf32, #tpu.memory_space<vmem>>, %arg4: memref<2x128x128xbf16, #tpu.memory_space<vmem>>, %arg5: memref<2x1x128xf32, #tpu.memory_space<vmem>>, %arg6: memref<128x128xbf16, #tpu.memory_space<vmem>>, %arg7: memref<8x128xf32, #tpu.memory_space<vmem>>) attributes {dimension_semantics = [#tpu.dimension_semantics<parallel>], iteration_bounds = array<i64: 2>, scalar_prefetch = 0 : i64, scratch_operands = 0 : i64, tpu.core_type = #tpu.core_type<tc>, window_params = [{transform_indices = @transform_0, window_bounds = array<i64: 8, 192>}, {pipeline_mode = #tpu.pipeline_mode<synchronous>, transform_indices = @transform_1, window_bounds = array<i64: 192, 128>}, {pipeline_mode = #tpu.pipeline_mode<synchronous>, transform_indices = @transform_2, window_bounds = array<i64: 1, 128>}, {pipeline_mode = #tpu.pipeline_mode<synchronous>, transform_indices = @transform_3, window_bounds = array<i64: 2, 128, 128>}, {pipeline_mode = #tpu.pipeline_mode<synchronous>, transform_indices = @transform_4, window_bounds = array<i64: 2, 1, 128>}, {pipeline_mode = #tpu.pipeline_mode<synchronous>, transform_indices = @transform_5, window_bounds = array<i64: 128, 128>}, {transform_indices = @transform_6, window_bounds = array<i64: 8, 128>}]} {
    %c0 = arith.constant 0 : index
    %c0_0 = arith.constant 0 : index
    %0 = vector.load %arg1[%c0, %c0_0] : memref<8x192xbf16, #tpu.memory_space<vmem>>, vector<8x192xbf16>
    %c0_1 = arith.constant 0 : index
    %c0_2 = arith.constant 0 : index
    %1 = vector.load %arg2[%c0_1, %c0_2] : memref<192x128xbf16, #tpu.memory_space<vmem>>, vector<192x128xbf16>
    %cst = arith.constant dense<0.000000e+00> : vector<8x128xf32>
    %2 = tpu.matmul %0, %1, %cst {dimension_numbers = #tpu.dot_dimension_numbers<[1], [0], [0], [1], [0, 0, 1, 1], [], []>} : vector<8x192xbf16>, vector<192x128xbf16>, vector<8x128xf32> -> vector<8x128xf32>
    %c0_3 = arith.constant 0 : index
    %c0_4 = arith.constant 0 : index
    %3 = vector.load %arg3[%c0_3, %c0_4] : memref<1x128xf32, #tpu.memory_space<vmem>>, vector<1x128xf32>
    %4 = vector.broadcast %3 : vector<1x128xf32> to vector<8x128xf32>
    %5 = arith.addf %2, %4 : vector<8x128xf32>
    %cst_5 = arith.constant 0.000000e+00 : f32
    %6 = vector.broadcast %cst_5 : f32 to vector<8x128xf32>
    %7 = arith.maximumf %5, %6 : vector<8x128xf32>
    %8 = arith.truncf %7 : vector<8x128xf32> to vector<8x128xbf16>
    %c0_6 = arith.constant 0 : index
    %c0_7 = arith.constant 0 : index
    %c0_8 = arith.constant 0 : index
    %9 = vector.load %arg4[%c0_6, %c0_7, %c0_8] : memref<2x128x128xbf16, #tpu.memory_space<vmem>>, vector<1x128x128xbf16>
    %10 = vector.shape_cast %9 : vector<1x128x128xbf16> to vector<128x128xbf16>
    %cst_9 = arith.constant dense<0.000000e+00> : vector<8x128xf32>
    %11 = tpu.matmul %8, %10, %cst_9 {dimension_numbers = #tpu.dot_dimension_numbers<[1], [0], [0], [1], [0, 0, 1, 1], [], []>} : vector<8x128xbf16>, vector<128x128xbf16>, vector<8x128xf32> -> vector<8x128xf32>
    %c0_10 = arith.constant 0 : index
    %c0_11 = arith.constant 0 : index
    %c0_12 = arith.constant 0 : index
    %12 = vector.load %arg5[%c0_10, %c0_11, %c0_12] : memref<2x1x128xf32, #tpu.memory_space<vmem>>, vector<1x1x128xf32>
    %13 = vector.shape_cast %12 : vector<1x1x128xf32> to vector<1x128xf32>
    %14 = vector.broadcast %13 : vector<1x128xf32> to vector<8x128xf32>
    %15 = arith.addf %11, %14 : vector<8x128xf32>
    %cst_13 = arith.constant 0.000000e+00 : f32
    %16 = vector.broadcast %cst_13 : f32 to vector<8x128xf32>
    %17 = arith.maximumf %15, %16 : vector<8x128xf32>
    %18 = arith.addf %7, %17 : vector<8x128xf32>
    %19 = arith.truncf %17 : vector<8x128xf32> to vector<8x128xbf16>
    %c1 = arith.constant 1 : index
    %c0_14 = arith.constant 0 : index
    %c0_15 = arith.constant 0 : index
    %20 = vector.load %arg4[%c1, %c0_14, %c0_15] : memref<2x128x128xbf16, #tpu.memory_space<vmem>>, vector<1x128x128xbf16>
    %21 = vector.shape_cast %20 : vector<1x128x128xbf16> to vector<128x128xbf16>
    %cst_16 = arith.constant dense<0.000000e+00> : vector<8x128xf32>
    %22 = tpu.matmul %19, %21, %cst_16 {dimension_numbers = #tpu.dot_dimension_numbers<[1], [0], [0], [1], [0, 0, 1, 1], [], []>} : vector<8x128xbf16>, vector<128x128xbf16>, vector<8x128xf32> -> vector<8x128xf32>
    %c1_17 = arith.constant 1 : index
    %c0_18 = arith.constant 0 : index
    %c0_19 = arith.constant 0 : index
    %23 = vector.load %arg5[%c1_17, %c0_18, %c0_19] : memref<2x1x128xf32, #tpu.memory_space<vmem>>, vector<1x1x128xf32>
    %24 = vector.shape_cast %23 : vector<1x1x128xf32> to vector<1x128xf32>
    %25 = vector.broadcast %24 : vector<1x128xf32> to vector<8x128xf32>
    %26 = arith.addf %22, %25 : vector<8x128xf32>
    %cst_20 = arith.constant 0.000000e+00 : f32
    %27 = vector.broadcast %cst_20 : f32 to vector<8x128xf32>
    %28 = arith.maximumf %26, %27 : vector<8x128xf32>
    %29 = arith.addf %18, %28 : vector<8x128xf32>
    %30 = arith.truncf %29 : vector<8x128xf32> to vector<8x128xbf16>
    %c0_21 = arith.constant 0 : index
    %c0_22 = arith.constant 0 : index
    %31 = vector.load %arg6[%c0_21, %c0_22] : memref<128x128xbf16, #tpu.memory_space<vmem>>, vector<128x128xbf16>
    %cst_23 = arith.constant dense<0.000000e+00> : vector<8x128xf32>
    %32 = tpu.matmul %30, %31, %cst_23 {dimension_numbers = #tpu.dot_dimension_numbers<[1], [0], [0], [1], [0, 0, 1, 1], [], []>} : vector<8x128xbf16>, vector<128x128xbf16>, vector<8x128xf32> -> vector<8x128xf32>
    %c0_24 = arith.constant 0 : index
    %c0_25 = arith.constant 0 : index
    %33 = vector.load %arg7[%c0_24, %c0_25] : memref<8x128xf32, #tpu.memory_space<vmem>>, vector<8x128xf32>
    tpu.vector_store %arg7[%c0_24, %c0_25], %32 {strides = array<i32>} : memref<8x128xf32, #tpu.memory_space<vmem>>, vector<8x128xf32>,
    return
  }
  func.func @transform_0(%arg0: i32) -> (i32, i32) {
    %c0_i32 = arith.constant 0 : i32
    %c0_i32_0 = arith.constant 0 : i32
    return %arg0, %c0_i32 : i32, i32
  }
  func.func @transform_1(%arg0: i32) -> (i32, i32) {
    %c0_i32 = arith.constant 0 : i32
    %c0_i32_0 = arith.constant 0 : i32
    %c0_i32_1 = arith.constant 0 : i32
    return %c0_i32, %c0_i32_0 : i32, i32
  }
  func.func @transform_2(%arg0: i32) -> (i32, i32) {
    %c0_i32 = arith.constant 0 : i32
    %c0_i32_0 = arith.constant 0 : i32
    %c0_i32_1 = arith.constant 0 : i32
    return %c0_i32, %c0_i32_0 : i32, i32
  }
  func.func @transform_3(%arg0: i32) -> (i32, i32, i32) {
    %c0_i32 = arith.constant 0 : i32
    %c0_i32_0 = arith.constant 0 : i32
    %c0_i32_1 = arith.constant 0 : i32
    %c0_i32_2 = arith.constant 0 : i32
    return %c0_i32, %c0_i32_0, %c0_i32_1 : i32, i32, i32
  }
  func.func @transform_4(%arg0: i32) -> (i32, i32, i32) {
    %c0_i32 = arith.constant 0 : i32
    %c0_i32_0 = arith.constant 0 : i32
    %c0_i32_1 = arith.constant 0 : i32
    %c0_i32_2 = arith.constant 0 : i32
    return %c0_i32, %c0_i32_0, %c0_i32_1 : i32, i32, i32
  }
  func.func @transform_5(%arg0: i32) -> (i32, i32) {
    %c0_i32 = arith.constant 0 : i32
    %c0_i32_0 = arith.constant 0 : i32
    %c0_i32_1 = arith.constant 0 : i32
    return %c0_i32, %c0_i32_0 : i32, i32
  }
  func.func @transform_6(%arg0: i32) -> (i32, i32) {
    %c0_i32 = arith.constant 0 : i32
    %c0_i32_0 = arith.constant 0 : i32
    return %arg0, %c0_i32 : i32, i32
  }
}

</mosaic_0001>

<llo_original>
// kernel: tpu_custom_call.1
$region0: #{tpu_custom_call.1}
  #allocation0 [shape = 'u32[]', space=smem, size = 0x4, offset = 0x4, fixed_abs, tag = 'smem constant byte address 0x4 - core index']
  #allocation1 [shape = 'u32[144,128]{1,0:T(1,128)}', space=vmem, size = 0x12000, scoped, tag = 'internal scratch']
  %s0 = inlined_call_operand.hbm [shape: bf16[16,192], index: 0, kind: input, shape index: {}]
  %s1 = inlined_call_operand.hbm [shape: bf16[192,128], index: 1, kind: input, shape index: {}]
  %s2 = inlined_call_operand.vmem [shape: f32[1,128], index: 2, kind: input, shape index: {}]
  %s3 = inlined_call_operand.hbm [shape: bf16[2,128,128], index: 3, kind: input, shape index: {}]
  %s4 = inlined_call_operand.vmem [shape: f32[2,1,128], index: 4, kind: input, shape index: {}]
  %s5 = inlined_call_operand.hbm [shape: bf16[128,128], index: 5, kind: input, shape index: {}]
  %s6 = inlined_call_operand.hbm [shape: f32[16,128], index: 6, kind: output, shape index: {}]
  %s7 = sld [smem:[#allocation0]]
  $region73: #{tpu_custom_call.1} parent=0
    _
  %s9 = ssub.s32 1, %s7
  %s10 = scalar_select 0, %s9, %s7
  $region1: #{tpu_custom_call.1} parent=0
    #allocation2 [shape = 'u8[8192]{0}', space=vmem, size = 0x2000, scoped, tag = 'input window, operand 0']
    #allocation3 [shape = 's32[2]{0}', space=sflag, size = 0x8, scoped, tag = 'scoped memory for tpu_custom_call.1']
    #allocation4 [shape = 's32[2]{0}', space=sflag, size = 0x8, scoped, tag = 'scoped memory for tpu_custom_call.1']
    #allocation5 [shape = 'u8[49152]{0}', space=vmem, size = 0xc000, scoped, tag = 'input window, operand 1, single buffered']
    #allocation6 [shape = 's32[1]{0}', space=sflag, size = 0x4, scoped, tag = 'scoped memory for tpu_custom_call.1']
    #allocation7 [shape = 'u8[65536]{0}', space=vmem, size = 0x10000, scoped, tag = 'input window, operand 3, single buffered']
    #allocation8 [shape = 'u8[32768]{0}', space=vmem, size = 0x8000, scoped, tag = 'input window, operand 5, single buffered']
    #allocation9 [shape = 's32[1]{0}', space=sflag, size = 0x4, scoped, tag = 'scoped memory for tpu_custom_call.1']
    #allocation10 [shape = 'u8[8192]{0}', space=vmem, size = 0x2000, scoped, tag = 'output window, operand 0']
    %11 = vsyncpa [#allocation3], 0
    %s12 = scalar_lea.sflag [#allocation3], 1
    %13 = vsyncpa %s12, 0
    %14 = vsyncpa [#allocation6], 0
    %15 = vsyncpa [#allocation9], 0
    %16 = vsyncpa [#allocation4], 0
    %s17 = scalar_lea.sflag [#allocation4], 1
    %18 = vsyncpa %s17, 0
    loop: start=0, step=1, limit=4
    $region2: #{tpu_custom_call.1} parent=1 // loop_pre_header
      _
    $region3: #{tpu_custom_call.1} parent=1 // loop_header
      %s20 = sphi 0, %s24
      %p21 = scmp.ge.s32.totalorder %s20, 4
      %s30 = sphi 0, %s32
      %s33 = sphi 0, %s30
      %s34 = sphi 0, %s33
      %s50 = sphi 0, %s34
      %s54 = sphi 0, %s54
      %s56 = sphi 0, %s54
      %s57 = sphi 0, %s56
      %s71 = sphi 0, %s57
      %s75 = sphi 0, %s75
      %s77 = sphi 0, %s75
      %s78 = sphi 0, %s77
      %s92 = sphi 0, %s78
      %s96 = sphi 0, %s96
      %s98 = sphi 0, %s96
      %s99 = sphi 0, %s98
      %s113 = sphi 0, %s99
      %s117 = sphi 0, %s117
      %s119 = sphi 0, %s117
      %s120 = sphi 0, %s119
      %s134 = sphi 0, %s120
      %s138 = sphi 0, %s138
      %s140 = sphi 0, %s138
      %s141 = sphi 0, %s140
      %s155 = sphi 0, %s141
      %s161 = sphi 0, %s163
      %s164 = sphi 0, %s161
      %s165 = sphi 0, %s164
      %s181 = sphi 0, %s165
    $region4: #{tpu_custom_call.1} parent=1 // loop_header_branch
      %23 = sbr.rel (%p21) target = $region8
    $region5: #{tpu_custom_call.1} parent=1 // loop_body
      %s25 = ssub.s32 %s20, 1
      %s26 = ssub.s32 %s20, 2
      %s27 = sadd.s32 %s20, 1
      %s28 = ssub.s32 %s20, %s27
      %p29 = scmp.eq.s32.totalorder %s28, 0
      %s31 = sadd.s32 %s30, 1
      %s32 = scalar_select %p29, %s30, %s31
      %p35 = pneg %p29
      %p36 = scmp.eq.s32.totalorder %s20, 1
      %p37 = por %p35, %p36
      %p38 = scmp.ne.s32.totalorder %s30, %s33
      %p39 = scmp.eq.s32.totalorder %s20, 0
      %p40 = por %p38, %p39
      %p41 = scmp.ne.s32.totalorder %s30, %s33
      %p42 = scmp.eq.s32.totalorder %s25, 1
      %p43 = por %p41, %p42
      %p44 = scmp.ne.s32.totalorder %s33, %s34
      %p45 = scmp.eq.s32.totalorder %s25, 0
      %p46 = por %p44, %p45
      %p47 = scmp.ne.s32.totalorder %s33, %s34
      %p48 = scmp.eq.s32.totalorder %s26, 1
      %p49 = por %p47, %p48
      %p51 = scmp.ne.s32.totalorder %s34, %s50
      %p52 = scmp.eq.s32.totalorder %s26, 0
      %p53 = por %p51, %p52
      %s55 = sadd.s32 %s54, 1
      %p58 = scmp.eq.s32.totalorder %s20, 1
      %p59 = scmp.ne.s32.totalorder %s54, %s56
      %p60 = scmp.eq.s32.totalorder %s20, 0
      %p61 = por %p59, %p60
      %p62 = scmp.ne.s32.totalorder %s54, %s56
      %p63 = scmp.eq.s32.totalorder %s25, 1
      %p64 = por %p62, %p63
      %p65 = scmp.ne.s32.totalorder %s56, %s57
      %p66 = scmp.eq.s32.totalorder %s25, 0
      %p67 = por %p65, %p66
      %p68 = scmp.ne.s32.totalorder %s56, %s57
      %p69 = scmp.eq.s32.totalorder %s26, 1
      %p70 = por %p68, %p69
      %p72 = scmp.ne.s32.totalorder %s57, %s71
      %p73 = scmp.eq.s32.totalorder %s26, 0
      %p74 = por %p72, %p73
      %s76 = sadd.s32 %s75, 1
      %p79 = scmp.eq.s32.totalorder %s20, 1
      %p80 = scmp.ne.s32.totalorder %s75, %s77
      %p81 = scmp.eq.s32.totalorder %s20, 0
      %p82 = por %p80, %p81
      %p83 = scmp.ne.s32.totalorder %s75, %s77
      %p84 = scmp.eq.s32.totalorder %s25, 1
      %p85 = por %p83, %p84
      %p86 = scmp.ne.s32.totalorder %s77, %s78
      %p87 = scmp.eq.s32.totalorder %s25, 0
      %p88 = por %p86, %p87
      %p89 = scmp.ne.s32.totalorder %s77, %s78
      %p90 = scmp.eq.s32.totalorder %s26, 1
      %p91 = por %p89, %p90
      %p93 = scmp.ne.s32.totalorder %s78, %s92
      %p94 = scmp.eq.s32.totalorder %s26, 0
      %p95 = por %p93, %p94
      %s97 = sadd.s32 %s96, 1
      %p100 = scmp.eq.s32.totalorder %s20, 1
      %p101 = scmp.ne.s32.totalorder %s96, %s98
      %p102 = scmp.eq.s32.totalorder %s20, 0
      %p103 = por %p101, %p102
      %p104 = scmp.ne.s32.totalorder %s96, %s98
      %p105 = scmp.eq.s32.totalorder %s25, 1
      %p106 = por %p104, %p105
      %p107 = scmp.ne.s32.totalorder %s98, %s99
      %p108 = scmp.eq.s32.totalorder %s25, 0
      %p109 = por %p107, %p108
      %p110 = scmp.ne.s32.totalorder %s98, %s99
      %p111 = scmp.eq.s32.totalorder %s26, 1
      %p112 = por %p110, %p111
      %p114 = scmp.ne.s32.totalorder %s99, %s113
      %p115 = scmp.eq.s32.totalorder %s26, 0
      %p116 = por %p114, %p115
      %s118 = sadd.s32 %s117, 1
      %p121 = scmp.eq.s32.totalorder %s20, 1
      %p122 = scmp.ne.s32.totalorder %s117, %s119
      %p123 = scmp.eq.s32.totalorder %s20, 0
      %p124 = por %p122, %p123
      %p125 = scmp.ne.s32.totalorder %s117, %s119
      %p126 = scmp.eq.s32.totalorder %s25, 1
      %p127 = por %p125, %p126
      %p128 = scmp.ne.s32.totalorder %s119, %s120
      %p129 = scmp.eq.s32.totalorder %s25, 0
      %p130 = por %p128, %p129
      %p131 = scmp.ne.s32.totalorder %s119, %s120
      %p132 = scmp.eq.s32.totalorder %s26, 1
      %p133 = por %p131, %p132
      %p135 = scmp.ne.s32.totalorder %s120, %s134
      %p136 = scmp.eq.s32.totalorder %s26, 0
      %p137 = por %p135, %p136
      %s139 = sadd.s32 %s138, 1
      %p142 = scmp.eq.s32.totalorder %s20, 1
      %p143 = scmp.ne.s32.totalorder %s138, %s140
      %p144 = scmp.eq.s32.totalorder %s20, 0
      %p145 = por %p143, %p144
      %p146 = scmp.ne.s32.totalorder %s138, %s140
      %p147 = scmp.eq.s32.totalorder %s25, 1
      %p148 = por %p146, %p147
      %p149 = scmp.ne.s32.totalorder %s140, %s141
      %p150 = scmp.eq.s32.totalorder %s25, 0
      %p151 = por %p149, %p150
      %p152 = scmp.ne.s32.totalorder %s140, %s141
      %p153 = scmp.eq.s32.totalorder %s26, 1
      %p154 = por %p152, %p153
      %p156 = scmp.ne.s32.totalorder %s141, %s155
      %p157 = scmp.eq.s32.totalorder %s26, 0
      %p158 = por %p156, %p157
      %s159 = ssub.s32 %s20, %s27
      %p160 = scmp.eq.s32.totalorder %s159, 0
      %s162 = sadd.s32 %s161, 1
      %s163 = scalar_select %p160, %s161, %s162
      %p166 = pneg %p160
      %p167 = scmp.eq.s32.totalorder %s20, 1
      %p168 = por %p166, %p167
      %p169 = scmp.ne.s32.totalorder %s161, %s164
      %p170 = scmp.eq.s32.totalorder %s20, 0
      %p171 = por %p169, %p170
      %p172 = scmp.ne.s32.totalorder %s161, %s164
      %p173 = scmp.eq.s32.totalorder %s25, 1
      %p174 = por %p172, %p173
      %p175 = scmp.ne.s32.totalorder %s164, %s165
      %p176 = scmp.eq.s32.totalorder %s25, 0
      %p177 = por %p175, %p176
      %p178 = scmp.ne.s32.totalorder %s164, %s165
      %p179 = scmp.eq.s32.totalorder %s26, 1
      %p180 = por %p178, %p179
      %p182 = scmp.ne.s32.totalorder %s165, %s181
      %p183 = scmp.eq.s32.totalorder %s26, 0
      %p184 = por %p182, %p183
      %p185 = scmp.le.s32.totalorder 1, %s20
      %p186 = scmp.lt.s32.totalorder %s20, 3
      %p187 = pnand %p185, %p186
      %p188 = pneg %p187
      // Predicated region
      $region9: #{tpu_custom_call.1} parent=5 // pred_check
        _
      $region10: #{tpu_custom_call.1} parent=5 // pred_check_branch
        %190 = sbr.rel (%p187) target = $region12
      $region11: #{tpu_custom_call.1} parent=5 // pred_region
        %s191 = ssub.s32 %s20, 1
        // Predicated region
        $region13: #{tpu_custom_call.1} parent=11 // pred_check
          %p192 = pneg %p67
        $region14: #{tpu_custom_call.1} parent=11 // pred_check_branch
          %194 = sbr.rel (%p192) target = $region16
        $region15: #{tpu_custom_call.1} parent=11 // pred_region
          %s196 = ssub.s32 1536, 1536
          %197 = vsyncadd [#allocation6], %s196
          %s198 = sshll.u32 [#allocation5], 4
          %s199 = int_to_ptr.vmem [resolvable:$true] %s198
          %204 = dma.hbm_to_vmem [thread:$0]  %s1, 1536, %s199, [#allocation6], 64, 64, 4
        $region16: #{tpu_custom_call.1} parent=11 // pred_fallthru
          _
        // Predicated region
        $region17: #{tpu_custom_call.1} parent=11 // pred_check
          %p205 = pneg %p88
        $region18: #{tpu_custom_call.1} parent=11 // pred_check_branch
          %207 = sbr.rel (%p205) target = $region20
        $region19: #{tpu_custom_call.1} parent=11 // pred_region
          _
        $region20: #{tpu_custom_call.1} parent=11 // pred_fallthru
          _
        // Predicated region
        $region21: #{tpu_custom_call.1} parent=11 // pred_check
          %p208 = pneg %p109
        $region22: #{tpu_custom_call.1} parent=11 // pred_check_branch
          %210 = sbr.rel (%p208) target = $region24
        $region23: #{tpu_custom_call.1} parent=11 // pred_region
          %s212 = ssub.s32 2048, 2048
          %213 = vsyncadd [#allocation6], %s212
          %s214 = sshll.u32 [#allocation7], 4
          %s215 = int_to_ptr.vmem [resolvable:$true] %s214
          %220 = dma.hbm_to_vmem [thread:$0]  %s3, 2048, %s215, [#allocation6], 64, 64, 4
        $region24: #{tpu_custom_call.1} parent=11 // pred_fallthru
          _
        // Predicated region
        $region25: #{tpu_custom_call.1} parent=11 // pred_check
          %p221 = pneg %p130
        $region26: #{tpu_custom_call.1} parent=11 // pred_check_branch
          %223 = sbr.rel (%p221) target = $region28
        $region27: #{tpu_custom_call.1} parent=11 // pred_region
          _
        $region28: #{tpu_custom_call.1} parent=11 // pred_fallthru
          _
        // Predicated region
        $region29: #{tpu_custom_call.1} parent=11 // pred_check
          %p224 = pneg %p151
        $region30: #{tpu_custom_call.1} parent=11 // pred_check_branch
          %226 = sbr.rel (%p224) target = $region32
        $region31: #{tpu_custom_call.1} parent=11 // pred_region
          %s228 = ssub.s32 1024, 1024
          %229 = vsyncadd [#allocation9], %s228
          %s230 = sshll.u32 [#allocation8], 4
          %s231 = int_to_ptr.vmem [resolvable:$true] %s230
          %236 = dma.hbm_to_vmem [thread:$0]  %s5, 1024, %s231, [#allocation9], 64, 64, 4
        $region32: #{tpu_custom_call.1} parent=11 // pred_fallthru
          _
      $region12: #{tpu_custom_call.1} parent=5 // pred_fallthru
        _
      %p237 = scmp.lt.s32.totalorder %s20, 2
      // Predicated region
      $region33: #{tpu_custom_call.1} parent=5 // pred_check
        %p238 = pneg %p237
      $region34: #{tpu_custom_call.1} parent=5 // pred_check_branch
        %240 = sbr.rel (%p238) target = $region36
      $region35: #{tpu_custom_call.1} parent=5 // pred_region
        // Predicated region
        $region37: #{tpu_custom_call.1} parent=35 // pred_check
          %p241 = pneg %p40
        $region38: #{tpu_custom_call.1} parent=35 // pred_check_branch
          %243 = sbr.rel (%p241) target = $region40
        $region39: #{tpu_custom_call.1} parent=35 // pred_region
          %s244 = sand.u32 %s30, 1
          %s245 = scalar_lea.sflag [#allocation3], %s244
          %s246 = sand.u32 %s30, 1
          %s247 = smul.addr %s246, 8
          %s248 = scalar_lea.vmem [#allocation2], %s247
          %s250 = ssub.s32 128, 128
          %251 = vsyncadd %s245, %s250
          %s252 = smul.addr %s20, 2
          %s253 = smul.addr %s252, 64
          %s254 = scalar_lea.hbm %s0, %s253
          %s256 = sshll.u32 %s248, 4
          %s257 = int_to_ptr.vmem [resolvable:$true] %s256
          %259 = dma.hbm_to_vmem [thread:$0]  %s254, 128, %s257, %s245
        $region40: #{tpu_custom_call.1} parent=35 // pred_fallthru
          _
      $region36: #{tpu_custom_call.1} parent=5 // pred_fallthru
        _
      %p260 = scmp.le.s32.totalorder 1, %s20
      %p261 = scmp.lt.s32.totalorder %s20, 3
      %p262 = pnand %p260, %p261
      %p263 = pneg %p262
      // Predicated region
      $region41: #{tpu_custom_call.1} parent=5 // pred_check
        _
      $region42: #{tpu_custom_call.1} parent=5 // pred_check_branch
        %265 = sbr.rel (%p262) target = $region44
      $region43: #{tpu_custom_call.1} parent=5 // pred_region
        %s266 = ssub.s32 %s20, 1
        %s267 = sand.u32 %s33, 1
        %s268 = scalar_lea.sflag [#allocation3], %s267
        %s269 = sand.u32 %s33, 1
        %s270 = smul.addr %s269, 8
        %s271 = scalar_lea.vmem [#allocation2], %s270
        // Predicated region
        $region45: #{tpu_custom_call.1} parent=43 // pred_check
          %p272 = pneg %p46
        $region46: #{tpu_custom_call.1} parent=43 // pred_check_branch
          %274 = sbr.rel (%p272) target = $region48
        $region47: #{tpu_custom_call.1} parent=43 // pred_region
          %275 = dma.done %s268, 128
        $region48: #{tpu_custom_call.1} parent=43 // pred_fallthru
          _
        // Predicated region
        $region49: #{tpu_custom_call.1} parent=43 // pred_check
          %p276 = pneg %p67
        $region50: #{tpu_custom_call.1} parent=43 // pred_check_branch
          %278 = sbr.rel (%p276) target = $region52
        $region51: #{tpu_custom_call.1} parent=43 // pred_region
          %279 = dma.done [#allocation6], 1536
        $region52: #{tpu_custom_call.1} parent=43 // pred_fallthru
          _
        // Predicated region
        $region53: #{tpu_custom_call.1} parent=43 // pred_check
          %p280 = pneg %p109
        $region54: #{tpu_custom_call.1} parent=43 // pred_check_branch
          %282 = sbr.rel (%p280) target = $region56
        $region55: #{tpu_custom_call.1} parent=43 // pred_region
          %283 = dma.done [#allocation6], 2048
        $region56: #{tpu_custom_call.1} parent=43 // pred_fallthru
          _
        // Predicated region
        $region57: #{tpu_custom_call.1} parent=43 // pred_check
          %p284 = pneg %p151
        $region58: #{tpu_custom_call.1} parent=43 // pred_check_branch
          %286 = sbr.rel (%p284) target = $region60
        $region59: #{tpu_custom_call.1} parent=43 // pred_region
          %287 = dma.done [#allocation9], 1024
        $region60: #{tpu_custom_call.1} parent=43 // pred_fallthru
          _
        %s288 = sand.u32 %s33, 1
        %s289 = scalar_lea.sflag [#allocation3], %s288
        %s290 = sand.u32 %s33, 1
        %s291 = smul.addr %s290, 8
        %s292 = scalar_lea.vmem [#allocation2], %s291
        %p293 = pneg %p46
        %p294 = pneg %p43
        %p295 = pneg %p67
        %p296 = pneg %p64
        %p297 = pneg %p88
        %p298 = pneg %p85
        %p299 = pneg %p109
        %p300 = pneg %p106
        %p301 = pneg %p130
        %p302 = pneg %p127
        %p303 = pneg %p151
        %p304 = pneg %p148
        %p305 = pneg %p177
        %p306 = pneg %p174
        %s307 = sand.u32 %s164, 1
        %s308 = scalar_lea.sflag [#allocation4], %s307
        %s309 = sand.u32 %s164, 1
        %s310 = smul.addr %s309, 8
        %s311 = scalar_lea.vmem [#allocation10], %s310
        %v313 = vld [vmem:[%s271] sm:$0xff]
        %v314 = vld [vmem:[#allocation5] sm:$0xf]
        %v315 = vld [vmem:[#allocation5 + $0x4] sm:$0xf]
        %v316 = vld [vmem:[#allocation5 + $0x8] sm:$0xf]
        %v317 = vld [vmem:[#allocation5 + $0xc] sm:$0xf]
        %v318 = vld [vmem:[#allocation5 + $0x10] sm:$0xf]
        %v319 = vld [vmem:[#allocation5 + $0x14] sm:$0xf]
        %v320 = vld [vmem:[#allocation5 + $0x18] sm:$0xf]
        %v321 = vld [vmem:[#allocation5 + $0x1c] sm:$0xf]
        %v322 = vld [vmem:[#allocation5 + $0x20] sm:$0xf]
        %v323 = vld [vmem:[#allocation5 + $0x24] sm:$0xf]
        %v324 = vld [vmem:[#allocation5 + $0x28] sm:$0xf]
        %v325 = vld [vmem:[#allocation5 + $0x2c] sm:$0xf]
        %v326 = vld [vmem:[#allocation5 + $0x30] sm:$0xf]
        %v327 = vld [vmem:[#allocation5 + $0x34] sm:$0xf]
        %v328 = vld [vmem:[#allocation5 + $0x38] sm:$0xf]
        %v329 = vld [vmem:[#allocation5 + $0x3c] sm:$0xf]
        %v330 = vld [vmem:[#allocation5 + $0x40] sm:$0xf]
        %v331 = vld [vmem:[#allocation5 + $0x44] sm:$0xf]
        %v332 = vld [vmem:[#allocation5 + $0x48] sm:$0xf]
        %v333 = vld [vmem:[#allocation5 + $0x4c] sm:$0xf]
        %v334 = vld [vmem:[#allocation5 + $0x50] sm:$0xf]
        %v335 = vld [vmem:[#allocation5 + $0x54] sm:$0xf]
        %v336 = vld [vmem:[#allocation5 + $0x58] sm:$0xf]
        %v337 = vld [vmem:[#allocation5 + $0x5c] sm:$0xf]
        %v338 = vld [vmem:[%s2] sm:$0x1]
        %v340 = vlaneseq
        %v341 = vshrl.u32 %v340, 7
        %v342 = vsub.s32 0, %v341
        %v343 = vrot.slane %v338, %v342
        %v346 = vunpack.c.l.b16 %v313
        %v347 = vunpack.c.h.b16 %v313
        %v348 = vpack.c.b16 %v346, %v346
        %v349 = vpack.c.b16 %v347, %v347
        %v375 = vunpack.c.l.b16 %v314
        %v376 = vunpack.c.l.b16 %v315
        %v377 = vunpack.c.l.b16 %v316
        %v378 = vunpack.c.l.b16 %v317
        %v379 = vunpack.c.l.b16 %v318
        %v380 = vunpack.c.l.b16 %v319
        %v381 = vunpack.c.l.b16 %v320
        %v382 = vunpack.c.l.b16 %v321
        %v383 = vunpack.c.l.b16 %v322
        %v384 = vunpack.c.l.b16 %v323
        %v385 = vunpack.c.l.b16 %v324
        %v386 = vunpack.c.l.b16 %v325
        %v387 = vunpack.c.l.b16 %v326
        %v388 = vunpack.c.l.b16 %v327
        %v389 = vunpack.c.l.b16 %v328
        %v390 = vunpack.c.l.b16 %v329
        %v391 = vunpack.c.l.b16 %v330
        %v392 = vunpack.c.l.b16 %v331
        %v393 = vunpack.c.l.b16 %v332
        %v394 = vunpack.c.l.b16 %v333
        %v395 = vunpack.c.l.b16 %v334
        %v396 = vunpack.c.l.b16 %v335
        %v397 = vunpack.c.l.b16 %v336
        %v398 = vunpack.c.l.b16 %v337
        %v399 = vpack.c.b16 %v376, %v375
        %v400 = vpack.c.b16 %v378, %v377
        %v401 = vpack.c.b16 %v380, %v379
        %v402 = vpack.c.b16 %v382, %v381
        %v403 = vpack.c.b16 %v384, %v383
        %v404 = vpack.c.b16 %v386, %v385
        %v405 = vpack.c.b16 %v388, %v387
        %v406 = vpack.c.b16 %v390, %v389
        %v407 = vpack.c.b16 %v392, %v391
        %v408 = vpack.c.b16 %v394, %v393
        %v409 = vpack.c.b16 %v396, %v395
        %v410 = vpack.c.b16 %v398, %v397
        %vm423 = vcmask 523264
        %v425 = vsel %vm423, %v349, 0
        %427 = vmatprep.subr.bf16.mxu0 0
        %428 = vmatpush1.bf16.msra.mxu0 %v399
        %429 = vmatprep.subr.bf16.mxu0 0
        %430 = vmatpush1.bf16.msra.mxu0 %v400
        %431 = vmatprep.subr.bf16.mxu0 0
        %432 = vmatpush1.bf16.msra.mxu0 %v401
        %433 = vmatprep.subr.bf16.mxu0 0
        %434 = vmatpush1.bf16.msra.mxu0 %v402
        %435 = vmatprep.subr.bf16.mxu0 0
        %436 = vmatpush1.bf16.msra.mxu0 %v403
        %437 = vmatprep.subr.bf16.mxu0 0
        %438 = vmatpush1.bf16.msra.mxu0 %v404
        %439 = vmatprep.subr.bf16.mxu0 0
        %440 = vmatpush1.bf16.msra.mxu0 %v405
        %441 = vmatprep.subr.bf16.mxu0 0
        %442 = vmatpush1.bf16.msra.mxu0 %v406
        %443 = vmatprep.subr.bf16.mxu0 0
        %444 = vmatpush1.bf16.msra.mxu0 %v407
        %445 = vmatprep.subr.bf16.mxu0 0
        %446 = vmatpush1.bf16.msra.mxu0 %v408
        %447 = vmatprep.subr.bf16.mxu0 0
        %448 = vmatpush1.bf16.msra.mxu0 %v409
        %449 = vmatprep.subr.bf16.mxu0 0
        %450 = vmatpush1.bf16.msra.mxu0 %v410
        %451 = vmatprep.subr.bf16.mxu0 0
        %452 = vmatpush1.bf16.msra.mxu0 0
        %453 = vmatprep.subr.bf16.mxu0 0
        %454 = vmatpush1.bf16.msra.mxu0 0
        %455 = vmatprep.subr.bf16.mxu0 0
        %456 = vmatpush1.bf16.msra.mxu0 0
        %457 = vmatprep.subr.bf16.mxu0 0
        %458 = vmatpush1.bf16.msra.mxu0 0
        %459 = vmatprep.mubr.bf16.mxu0 %v425
        %460 = vmatmul.mubr.bf16.gmra.mrb[0].mxu0 %v348
        %v461 = vpop.f32.mrb[0].mxu0
        %v462 = vadd.f32 %v343, %v461
        %v463 = vpop.f32.mrb[0].mxu0
        %v464 = vpop.f32.mrb[0].mxu0
        %v465 = vpop.f32.mrb[0].mxu0
        %466 = vdwg.mxu0
        %v467 = vmax.f32 %v462, 0.0
        %v468 = vpack.c.bf16 %v467, %v467
        %v469 = vld [vmem:[#allocation7] sm:$0xf]
        %v470 = vld [vmem:[#allocation7 + $0x4] sm:$0xf]
        %v471 = vld [vmem:[#allocation7 + $0x8] sm:$0xf]
        %v472 = vld [vmem:[#allocation7 + $0xc] sm:$0xf]
        %v473 = vld [vmem:[#allocation7 + $0x10] sm:$0xf]
        %v474 = vld [vmem:[#allocation7 + $0x14] sm:$0xf]
        %v475 = vld [vmem:[#allocation7 + $0x18] sm:$0xf]
        %v476 = vld [vmem:[#allocation7 + $0x1c] sm:$0xf]
        %v477 = vld [vmem:[#allocation7 + $0x20] sm:$0xf]
        %v478 = vld [vmem:[#allocation7 + $0x24] sm:$0xf]
        %v479 = vld [vmem:[#allocation7 + $0x28] sm:$0xf]
        %v480 = vld [vmem:[#allocation7 + $0x2c] sm:$0xf]
        %v481 = vld [vmem:[#allocation7 + $0x30] sm:$0xf]
        %v482 = vld [vmem:[#allocation7 + $0x34] sm:$0xf]
        %v483 = vld [vmem:[#allocation7 + $0x38] sm:$0xf]
        %v484 = vld [vmem:[#allocation7 + $0x3c] sm:$0xf]
        %v485 = vld [vmem:[%s4] sm:$0x1]
        %v487 = vlaneseq
        %v488 = vshrl.u32 %v487, 7
        %v489 = vsub.s32 0, %v488
        %v490 = vrot.slane %v485, %v489
        %v508 = vunpack.c.l.b16 %v469
        %v509 = vunpack.c.l.b16 %v470
        %v510 = vunpack.c.l.b16 %v471
        %v511 = vunpack.c.l.b16 %v472
        %v512 = vunpack.c.l.b16 %v473
        %v513 = vunpack.c.l.b16 %v474
        %v514 = vunpack.c.l.b16 %v475
        %v515 = vunpack.c.l.b16 %v476
        %v516 = vunpack.c.l.b16 %v477
        %v517 = vunpack.c.l.b16 %v478
        %v518 = vunpack.c.l.b16 %v479
        %v519 = vunpack.c.l.b16 %v480
        %v520 = vunpack.c.l.b16 %v481
        %v521 = vunpack.c.l.b16 %v482
        %v522 = vunpack.c.l.b16 %v483
        %v523 = vunpack.c.l.b16 %v484
        %v524 = vpack.c.b16 %v509, %v508
        %v525 = vpack.c.b16 %v511, %v510
        %v526 = vpack.c.b16 %v513, %v512
        %v527 = vpack.c.b16 %v515, %v514
        %v528 = vpack.c.b16 %v517, %v516
        %v529 = vpack.c.b16 %v519, %v518
        %v530 = vpack.c.b16 %v521, %v520
        %v531 = vpack.c.b16 %v523, %v522
        %540 = vmatprep.subr.bf16.mxu0 0
        %541 = vmatpush1.bf16.msra.mxu0 %v524
        %542 = vmatprep.subr.bf16.mxu0 0
        %543 = vmatpush1.bf16.msra.mxu0 %v525
        %544 = vmatprep.subr.bf16.mxu0 0
        %545 = vmatpush1.bf16.msra.mxu0 %v526
        %546 = vmatprep.subr.bf16.mxu0 0
        %547 = vmatpush1.bf16.msra.mxu0 %v527
        %548 = vmatprep.subr.bf16.mxu0 0
        %549 = vmatpush1.bf16.msra.mxu0 %v528
        %550 = vmatprep.subr.bf16.mxu0 0
        %551 = vmatpush1.bf16.msra.mxu0 %v529
        %552 = vmatprep.subr.bf16.mxu0 0
        %553 = vmatpush1.bf16.msra.mxu0 %v530
        %554 = vmatprep.subr.bf16.mxu0 0
        %555 = vmatpush1.bf16.msra.mxu0 %v531
        %556 = vmatprep.subr.bf16.mxu0 0
        %557 = vmatpush1.bf16.msra.mxu0 0
        %558 = vmatprep.subr.bf16.mxu0 0
        %559 = vmatpush1.bf16.msra.mxu0 0
        %560 = vmatprep.subr.bf16.mxu0 0
        %561 = vmatpush1.bf16.msra.mxu0 0
        %562 = vmatprep.subr.bf16.mxu0 0
        %563 = vmatpush1.bf16.msra.mxu0 0
        %564 = vmatprep.subr.bf16.mxu0 0
        %565 = vmatpush1.bf16.msra.mxu0 0
        %566 = vmatprep.subr.bf16.mxu0 0
        %567 = vmatpush1.bf16.msra.mxu0 0
        %568 = vmatprep.subr.bf16.mxu0 0
        %569 = vmatpush1.bf16.msra.mxu0 0
        %570 = vmatprep.subr.bf16.mxu0 0
        %571 = vmatpush1.bf16.msra.mxu0 0
        %572 = vmatprep.mubr.bf16.mxu0 0
        %573 = vmatmul.mubr.bf16.gmra.mrb[0].mxu0 %v468
        %v574 = vpop.f32.mrb[0].mxu0
        %v575 = vadd.f32 %v490, %v574
        %v576 = vpop.f32.mrb[0].mxu0
        %v577 = vpop.f32.mrb[0].mxu0
        %v578 = vpop.f32.mrb[0].mxu0
        %579 = vdwg.mxu0
        %v580 = vmax.f32 %v575, 0.0
        %v581 = vadd.f32 %v467, %v580
        %v582 = vpack.c.bf16 %v580, %v580
        %s583 = scalar_lea.vmem [#allocation7], 64
        %v584 = vld [vmem:[%s583] sm:$0xf]
        %v585 = vld [vmem:[%s583 + $0x4] sm:$0xf]
        %v586 = vld [vmem:[%s583 + $0x8] sm:$0xf]
        %v587 = vld [vmem:[%s583 + $0xc] sm:$0xf]
        %v588 = vld [vmem:[%s583 + $0x10] sm:$0xf]
        %v589 = vld [vmem:[%s583 + $0x14] sm:$0xf]
        %v590 = vld [vmem:[%s583 + $0x18] sm:$0xf]
        %v591 = vld [vmem:[%s583 + $0x1c] sm:$0xf]
        %v592 = vld [vmem:[%s583 + $0x20] sm:$0xf]
        %v593 = vld [vmem:[%s583 + $0x24] sm:$0xf]
        %v594 = vld [vmem:[%s583 + $0x28] sm:$0xf]
        %v595 = vld [vmem:[%s583 + $0x2c] sm:$0xf]
        %v596 = vld [vmem:[%s583 + $0x30] sm:$0xf]
        %v597 = vld [vmem:[%s583 + $0x34] sm:$0xf]
        %v598 = vld [vmem:[%s583 + $0x38] sm:$0xf]
        %v599 = vld [vmem:[%s583 + $0x3c] sm:$0xf]
        %s600 = scalar_lea.vmem %s4, 1
        %v601 = vld [vmem:[%s600] sm:$0x1]
        %v603 = vlaneseq
        %v604 = vshrl.u32 %v603, 7
        %v605 = vsub.s32 0, %v604
        %v606 = vrot.slane %v601, %v605
        %v624 = vunpack.c.l.b16 %v584
        %v625 = vunpack.c.l.b16 %v585
        %v626 = vunpack.c.l.b16 %v586
        %v627 = vunpack.c.l.b16 %v587
        %v628 = vunpack.c.l.b16 %v588
        %v629 = vunpack.c.l.b16 %v589
        %v630 = vunpack.c.l.b16 %v590
        %v631 = vunpack.c.l.b16 %v591
        %v632 = vunpack.c.l.b16 %v592
        %v633 = vunpack.c.l.b16 %v593
        %v634 = vunpack.c.l.b16 %v594
        %v635 = vunpack.c.l.b16 %v595
        %v636 = vunpack.c.l.b16 %v596
        %v637 = vunpack.c.l.b16 %v597
        %v638 = vunpack.c.l.b16 %v598
        %v639 = vunpack.c.l.b16 %v599
        %v640 = vpack.c.b16 %v625, %v624
        %v641 = vpack.c.b16 %v627, %v626
        %v642 = vpack.c.b16 %v629, %v628
        %v643 = vpack.c.b16 %v631, %v630
        %v644 = vpack.c.b16 %v633, %v632
        %v645 = vpack.c.b16 %v635, %v634
        %v646 = vpack.c.b16 %v637, %v636
        %v647 = vpack.c.b16 %v639, %v638
        %656 = vmatprep.subr.bf16.mxu0 0
        %657 = vmatpush1.bf16.msra.mxu0 %v640
        %658 = vmatprep.subr.bf16.mxu0 0
        %659 = vmatpush1.bf16.msra.mxu0 %v641
        %660 = vmatprep.subr.bf16.mxu0 0
        %661 = vmatpush1.bf16.msra.mxu0 %v642
        %662 = vmatprep.subr.bf16.mxu0 0
        %663 = vmatpush1.bf16.msra.mxu0 %v643
        %664 = vmatprep.subr.bf16.mxu0 0
        %665 = vmatpush1.bf16.msra.mxu0 %v644
        %666 = vmatprep.subr.bf16.mxu0 0
        %667 = vmatpush1.bf16.msra.mxu0 %v645
        %668 = vmatprep.subr.bf16.mxu0 0
        %669 = vmatpush1.bf16.msra.mxu0 %v646
        %670 = vmatprep.subr.bf16.mxu0 0
        %671 = vmatpush1.bf16.msra.mxu0 %v647
        %672 = vmatprep.subr.bf16.mxu0 0
        %673 = vmatpush1.bf16.msra.mxu0 0
        %674 = vmatprep.subr.bf16.mxu0 0
        %675 = vmatpush1.bf16.msra.mxu0 0
        %676 = vmatprep.subr.bf16.mxu0 0
        %677 = vmatpush1.bf16.msra.mxu0 0
        %678 = vmatprep.subr.bf16.mxu0 0
        %679 = vmatpush1.bf16.msra.mxu0 0
        %680 = vmatprep.subr.bf16.mxu0 0
        %681 = vmatpush1.bf16.msra.mxu0 0
        %682 = vmatprep.subr.bf16.mxu0 0
        %683 = vmatpush1.bf16.msra.mxu0 0
        %684 = vmatprep.subr.bf16.mxu0 0
        %685 = vmatpush1.bf16.msra.mxu0 0
        %686 = vmatprep.subr.bf16.mxu0 0
        %687 = vmatpush1.bf16.msra.mxu0 0
        %688 = vmatprep.mubr.bf16.mxu0 0
        %689 = vmatmul.mubr.bf16.gmra.mrb[0].mxu0 %v582
        %v690 = vpop.f32.mrb[0].mxu0
        %v691 = vadd.f32 %v606, %v690
        %v692 = vpop.f32.mrb[0].mxu0
        %v693 = vpop.f32.mrb[0].mxu0
        %v694 = vpop.f32.mrb[0].mxu0
        %695 = vdwg.mxu0
        %v696 = vmax.f32 %v691, 0.0
        %v697 = vadd.f32 %v581, %v696
        %v698 = vpack.c.bf16 %v697, %v697
        %v699 = vld [vmem:[#allocation8] sm:$0xf]
        %v700 = vld [vmem:[#allocation8 + $0x4] sm:$0xf]
        %v701 = vld [vmem:[#allocation8 + $0x8] sm:$0xf]
        %v702 = vld [vmem:[#allocation8 + $0xc] sm:$0xf]
        %v703 = vld [vmem:[#allocation8 + $0x10] sm:$0xf]
        %v704 = vld [vmem:[#allocation8 + $0x14] sm:$0xf]
        %v705 = vld [vmem:[#allocation8 + $0x18] sm:$0xf]
        %v706 = vld [vmem:[#allocation8 + $0x1c] sm:$0xf]
        %v707 = vld [vmem:[#allocation8 + $0x20] sm:$0xf]
        %v708 = vld [vmem:[#allocation8 + $0x24] sm:$0xf]
        %v709 = vld [vmem:[#allocation8 + $0x28] sm:$0xf]
        %v710 = vld [vmem:[#allocation8 + $0x2c] sm:$0xf]
        %v711 = vld [vmem:[#allocation8 + $0x30] sm:$0xf]
        %v712 = vld [vmem:[#allocation8 + $0x34] sm:$0xf]
        %v713 = vld [vmem:[#allocation8 + $0x38] sm:$0xf]
        %v714 = vld [vmem:[#allocation8 + $0x3c] sm:$0xf]
        %v731 = vunpack.c.l.b16 %v699
        %v732 = vunpack.c.l.b16 %v700
        %v733 = vunpack.c.l.b16 %v701
        %v734 = vunpack.c.l.b16 %v702
        %v735 = vunpack.c.l.b16 %v703
        %v736 = vunpack.c.l.b16 %v704
        %v737 = vunpack.c.l.b16 %v705
        %v738 = vunpack.c.l.b16 %v706
        %v739 = vunpack.c.l.b16 %v707
        %v740 = vunpack.c.l.b16 %v708
        %v741 = vunpack.c.l.b16 %v709
        %v742 = vunpack.c.l.b16 %v710
        %v743 = vunpack.c.l.b16 %v711
        %v744 = vunpack.c.l.b16 %v712
        %v745 = vunpack.c.l.b16 %v713
        %v746 = vunpack.c.l.b16 %v714
        %v747 = vpack.c.b16 %v732, %v731
        %v748 = vpack.c.b16 %v734, %v733
        %v749 = vpack.c.b16 %v736, %v735
        %v750 = vpack.c.b16 %v738, %v737
        %v751 = vpack.c.b16 %v740, %v739
        %v752 = vpack.c.b16 %v742, %v741
        %v753 = vpack.c.b16 %v744, %v743
        %v754 = vpack.c.b16 %v746, %v745
        %763 = vmatprep.subr.bf16.mxu0 0
        %764 = vmatpush1.bf16.msra.mxu0 %v747
        %765 = vmatprep.subr.bf16.mxu0 0
        %766 = vmatpush1.bf16.msra.mxu0 %v748
        %767 = vmatprep.subr.bf16.mxu0 0
        %768 = vmatpush1.bf16.msra.mxu0 %v749
        %769 = vmatprep.subr.bf16.mxu0 0
        %770 = vmatpush1.bf16.msra.mxu0 %v750
        %771 = vmatprep.subr.bf16.mxu0 0
        %772 = vmatpush1.bf16.msra.mxu0 %v751
        %773 = vmatprep.subr.bf16.mxu0 0
        %774 = vmatpush1.bf16.msra.mxu0 %v752
        %775 = vmatprep.subr.bf16.mxu0 0
        %776 = vmatpush1.bf16.msra.mxu0 %v753
        %777 = vmatprep.subr.bf16.mxu0 0
        %778 = vmatpush1.bf16.msra.mxu0 %v754
        %779 = vmatprep.subr.bf16.mxu0 0
        %780 = vmatpush1.bf16.msra.mxu0 0
        %781 = vmatprep.subr.bf16.mxu0 0
        %782 = vmatpush1.bf16.msra.mxu0 0
        %783 = vmatprep.subr.bf16.mxu0 0
        %784 = vmatpush1.bf16.msra.mxu0 0
        %785 = vmatprep.subr.bf16.mxu0 0
        %786 = vmatpush1.bf16.msra.mxu0 0
        %787 = vmatprep.subr.bf16.mxu0 0
        %788 = vmatpush1.bf16.msra.mxu0 0
        %789 = vmatprep.subr.bf16.mxu0 0
        %790 = vmatpush1.bf16.msra.mxu0 0
        %791 = vmatprep.subr.bf16.mxu0 0
        %792 = vmatpush1.bf16.msra.mxu0 0
        %793 = vmatprep.subr.bf16.mxu0 0
        %794 = vmatpush1.bf16.msra.mxu0 0
        %795 = vmatprep.mubr.bf16.mxu0 0
        %796 = vmatmul.mubr.bf16.gmra.mrb[0].mxu0 %v698
        %v797 = vpop.f32.mrb[0].mxu0
        %v798 = vadd.f32 0.0, %v797
        %v799 = vpop.f32.mrb[0].mxu0
        %v800 = vpop.f32.mrb[0].mxu0
        %v801 = vpop.f32.mrb[0].mxu0
        %802 = vdwg.mxu0
        %803 = vst [vmem:[%s311] sm:$0xff] %v798
        %s804 = sand.u32 %s164, 1
        %s805 = scalar_lea.sflag [#allocation4], %s804
        %s806 = sand.u32 %s164, 1
        %s807 = smul.addr %s806, 8
        %s808 = scalar_lea.vmem [#allocation10], %s807
        // Predicated region
        $region61: #{tpu_custom_call.1} parent=43 // pred_check
          %p809 = pneg %p174
        $region62: #{tpu_custom_call.1} parent=43 // pred_check_branch
          %811 = sbr.rel (%p809) target = $region64
        $region63: #{tpu_custom_call.1} parent=43 // pred_region
          %s813 = ssub.s32 128, 128
          %814 = vsyncadd %s805, %s813
          %s815 = smul.addr %s25, 128
          %s816 = scalar_lea.hbm %s6, %s815
          %s818 = sshll.u32 %s808, 4
          %s819 = int_to_ptr.vmem [resolvable:$true] %s818
          %821 = dma.vmem_to_hbm [thread:$0]  %s819, 128, %s816, %s805
        $region64: #{tpu_custom_call.1} parent=43 // pred_fallthru
          _
      $region44: #{tpu_custom_call.1} parent=5 // pred_fallthru
        _
      %p822 = scmp.le.s32.totalorder 2, %s20
      // Predicated region
      $region65: #{tpu_custom_call.1} parent=5 // pred_check
        %p823 = pneg %p822
      $region66: #{tpu_custom_call.1} parent=5 // pred_check_branch
        %825 = sbr.rel (%p823) target = $region68
      $region67: #{tpu_custom_call.1} parent=5 // pred_region
        %s826 = ssub.s32 %s20, 2
        // Predicated region
        $region69: #{tpu_custom_call.1} parent=67 // pred_check
          %p827 = pneg %p180
        $region70: #{tpu_custom_call.1} parent=67 // pred_check_branch
          %829 = sbr.rel (%p827) target = $region72
        $region71: #{tpu_custom_call.1} parent=67 // pred_region
          %s830 = sand.u32 %s165, 1
          %s831 = scalar_lea.sflag [#allocation4], %s830
          %s832 = sand.u32 %s165, 1
          %s833 = smul.addr %s832, 8
          %s834 = scalar_lea.vmem [#allocation10], %s833
          %835 = dma.done %s831, 128
        $region72: #{tpu_custom_call.1} parent=67 // pred_fallthru
          _
      $region68: #{tpu_custom_call.1} parent=5 // pred_fallthru
        _
    $region6: #{tpu_custom_call.1} parent=1 // loop_footer
      %s24 = sadd.s32 1, %s20
    $region7: #{tpu_custom_call.1} parent=1 // loop_footer_branch
      %19 = sbr.rel target = $region3
    $region8: #{tpu_custom_call.1} parent=1 // loop_exit
      _
    %836 = vsyncpa [#allocation3], 1
    %s837 = scalar_lea.sflag [#allocation3], 1
    %838 = vsyncpa %s837, 1
    %839 = vsyncpa [#allocation6], 1
    %840 = vsyncpa [#allocation9], 1
    %841 = vsyncpa [#allocation4], 1
    %s842 = scalar_lea.sflag [#allocation4], 1
    %843 = vsyncpa %s842, 1

</llo_original>
